<compile_context>
chip_gen: v7x
topology: tpu7x:2x2x1
jax: 0.10.0
libtpu: 0.0.40
codegen_flags: <defaults>
</compile_context>

<pallas_src>
import functools

import jax
import jax.numpy as jnp
from jax import lax
from jax.experimental import pallas as pl
from jax.experimental.pallas import tpu as pltpu


_LANE = 128
_TN_MAX = 512  # per-tile output lanes; sized for v7x's smaller (64 MiB) VMEM


def _round_up(x, m):
    return (x + m - 1) // m * m


def _softplus(x):
    # Matches torch.nn.functional.softplus (beta=1, threshold=20).
    return jnp.where(x > 20.0, x, jnp.log1p(jnp.exp(jnp.minimum(x, 20.0))))


# ---------------------------------------------------------------------------
# Stage 1 kernel: x = ReLU(BatchNorm1d(Linear(emb)))  (train-mode batch stats)
# ---------------------------------------------------------------------------
def _decoder_kernel(emb_ref, w_ref, b_ref, gamma_ref, beta_ref, x_ref):
    h = jnp.dot(emb_ref[...], w_ref[...], preferred_element_type=jnp.float32) + b_ref[...]
    mu = jnp.mean(h, axis=0, keepdims=True)
    var = jnp.mean((h - mu) * (h - mu), axis=0, keepdims=True)  # biased variance
    h_hat = (h - mu) * lax.rsqrt(var + 1e-5)
    x_ref[...] = jnp.maximum(h_hat * gamma_ref[...] + beta_ref[...], 0.0)


# ---------------------------------------------------------------------------
# Stage 2 kernel: fused pi/disp/mean heads on one feature tile.
# One (N, nhid1) @ (nhid1, 3*TN) matmul (single MXU push), then the three
# per-head epilogues on lane-aligned slices of the fused result.
# ---------------------------------------------------------------------------
def _heads_kernel(x_ref, w_ref, b_ref, pi_ref, disp_ref, mean_ref, *, tn, matmul_dtype):
    x = x_ref[...].astype(matmul_dtype)
    y = jnp.dot(x, w_ref[...], preferred_element_type=jnp.float32) + b_ref[...]
    pi_ref[...] = jax.nn.sigmoid(y[:, 0 * tn:1 * tn])
    disp_ref[...] = jnp.clip(_softplus(y[:, 1 * tn:2 * tn]), 1e-4, 1e4)
    mean_ref[...] = jnp.clip(jnp.exp(y[:, 2 * tn:3 * tn]), 1e-5, 1e6)


# ---------------------------------------------------------------------------
# One-time parameter repack (done at init/load time, NOT per forward call).
# ---------------------------------------------------------------------------
def prepare_params(params, matmul_dtype=jnp.float32):
    """Repack PyTorch-layout params into kernel layout.

    - Linear weights (out, in) -> (in, out); 1-D vectors -> (1, F).
    - The three head weights/biases are fused and padded to a multiple of TN,
      interleaved per tile as [pi | disp | mean] so each grid step reads one
      contiguous (nhid1, 3*TN) block and does a single matmul.
    """
    nhid1 = params["w_dec"].shape[0]
    nfeat = params["w_pi"].shape[0]

    tn = min(_TN_MAX, _round_up(nfeat, _LANE))
    nfeat_pad = _round_up(nfeat, tn)
    ntiles = nfeat_pad // tn
    pad = nfeat_pad - nfeat

    def pack_w(w):  # (nfeat, nhid1) -> (nhid1, nfeat_pad)
        return jnp.pad(w.T.astype(jnp.float32), ((0, 0), (0, pad)))

    def pack_b(b):  # (nfeat,) -> (nfeat_pad,)
        return jnp.pad(b.astype(jnp.float32), (0, pad))

    # (nhid1, 3, nfeat_pad) -> tile-major interleave -> (nhid1, ntiles * 3 * tn)
    w_heads = jnp.stack(
        [pack_w(params["w_pi"]), pack_w(params["w_disp"]), pack_w(params["w_mean"])], axis=1
    )
    w_heads = (
        w_heads.reshape(nhid1, 3, ntiles, tn)
        .transpose(0, 2, 1, 3)
        .reshape(nhid1, ntiles * 3 * tn)
        .astype(matmul_dtype)
    )
    b_heads = jnp.stack(
        [pack_b(params["b_pi"]), pack_b(params["b_disp"]), pack_b(params["b_mean"])], axis=0
    )
    b_heads = (
        b_heads.reshape(3, ntiles, tn).transpose(1, 0, 2).reshape(1, ntiles * 3 * tn)
    )  # bias stays f32 (added post-accumulation)

    return {
        "w_dec": params["w_dec"].T.astype(jnp.float32),
        "b_dec": params["b_dec"].reshape(1, nhid1).astype(jnp.float32),
        "bn_gamma": params["bn_gamma"].reshape(1, nhid1).astype(jnp.float32),
        "bn_beta": params["bn_beta"].reshape(1, nhid1).astype(jnp.float32),
        "w_heads": w_heads,
        "b_heads": b_heads,
        "nfeat": nfeat,
        "nfeat_pad": nfeat_pad,
        "tn": tn,
        "ntiles": ntiles,
        "matmul_dtype": matmul_dtype,
    }


# ---------------------------------------------------------------------------
# Forward wrapper.
# ---------------------------------------------------------------------------
def zinb_decoder(emb, packed):
    """emb: (N, nhid1) float32. packed: output of prepare_params()."""
    N, nhid1 = emb.shape
    nfeat = packed["nfeat"]
    nfeat_pad = packed["nfeat_pad"]
    tn = packed["tn"]
    ntiles = packed["ntiles"]
    mm_dtype = packed["matmul_dtype"]

    vmem = pl.BlockSpec(memory_space=pltpu.MemorySpace.VMEM)

    # ---- stage 1: Linear + BN(batch stats) + ReLU (needs full batch resident) ----
    x = pl.pallas_call(
        _decoder_kernel,
        out_shape=jax.ShapeDtypeStruct((N, nhid1), jnp.float32),
        in_specs=[vmem] * 5,
        out_specs=vmem,
    )(emb, packed["w_dec"], packed["b_dec"], packed["bn_gamma"], packed["bn_beta"])

    # ---- stage 2: fused heads, pipelined over feature tiles ----
    w_itemsize = jnp.dtype(mm_dtype).itemsize
    vmem_bytes = 2 * (
        N * nhid1 * 4                 # resident x (counted double-buffered, conservative)
        + nhid1 * 3 * tn * w_itemsize  # fused head-weight tile
        + 3 * tn * 4                   # fused bias tile
        + 3 * N * tn * 4               # three output tiles
    ) + (4 << 20)                      # compiler scratch headroom
    vmem_bytes = int(min(max(vmem_bytes, 16 << 20), 64 << 20))

    out_sds = jax.ShapeDtypeStruct((N, nfeat_pad), jnp.float32)
    kernel = functools.partial(_heads_kernel, tn=tn, matmul_dtype=mm_dtype)

    pi, disp, mean = pl.pallas_call(
        kernel,
        out_shape=(out_sds, out_sds, out_sds),
        grid_spec=pltpu.PrefetchScalarGridSpec(
            num_scalar_prefetch=0,
            grid=(ntiles,),
            in_specs=[
                pl.BlockSpec((N, nhid1), lambda j: (0, 0)),       # x: resident across tiles
                pl.BlockSpec((nhid1, 3 * tn), lambda j: (0, j)),  # fused head weights (pipelined)
                pl.BlockSpec((1, 3 * tn), lambda j: (0, j)),      # fused head biases (pipelined)
            ],
            out_specs=[
                pl.BlockSpec((N, tn), lambda j: (0, j)),
                pl.BlockSpec((N, tn), lambda j: (0, j)),
                pl.BlockSpec((N, tn), lambda j: (0, j)),
            ],
        ),
        compiler_params=pltpu.CompilerParams(
            dimension_semantics=("parallel",),   # lets v7x's 2 TCs split feature tiles
            vmem_limit_bytes=vmem_bytes,
        ),
    )(x, packed["w_heads"], packed["b_heads"])

    if nfeat_pad != nfeat:
        pi, disp, mean = pi[:, :nfeat], disp[:, :nfeat], mean[:, :nfeat]
    return [pi, disp, mean]


# ---------------------------------------------------------------------------
# Synthetic parameters (PyTorch nn.Linear layout: weight (out, in)).
# ---------------------------------------------------------------------------
def init_params(key, nhid1, nfeat):
    ks = jax.random.split(key, 8)
    scale1 = 1.0 / jnp.sqrt(nhid1)
    return {
        "w_dec": jax.random.uniform(ks[0], (nhid1, nhid1), jnp.float32, -scale1, scale1),
        "b_dec": jax.random.uniform(ks[1], (nhid1,), jnp.float32, -scale1, scale1),
        "bn_gamma": jnp.ones((nhid1,), jnp.float32),
        "bn_beta": jnp.zeros((nhid1,), jnp.float32),
        "w_pi": jax.random.uniform(ks[2], (nfeat, nhid1), jnp.float32, -scale1, scale1),
        "b_pi": jax.random.uniform(ks[3], (nfeat,), jnp.float32, -scale1, scale1),
        "w_disp": jax.random.uniform(ks[4], (nfeat, nhid1), jnp.float32, -scale1, scale1),
        "b_disp": jax.random.uniform(ks[5], (nfeat,), jnp.float32, -scale1, scale1),
        "w_mean": jax.random.uniform(ks[6], (nfeat, nhid1), jnp.float32, -scale1, scale1),
        "b_mean": jax.random.uniform(ks[7], (nfeat,), jnp.float32, -scale1, scale1),
    }


def zinb_decoder_ref(emb, params):
    """Pure-JAX reference (train-mode BatchNorm1d, biased variance)."""
    h = emb @ params["w_dec"].T + params["b_dec"]
    mu = jnp.mean(h, axis=0, keepdims=True)
    var = jnp.mean((h - mu) ** 2, axis=0, keepdims=True)
    x = jnp.maximum((h - mu) / jnp.sqrt(var + 1e-5) * params["bn_gamma"] + params["bn_beta"], 0.0)
    pi = jax.nn.sigmoid(x @ params["w_pi"].T + params["b_pi"])
    disp = jnp.clip(_softplus(x @ params["w_disp"].T + params["b_disp"]), 1e-4, 1e4)
    mean = jnp.clip(jnp.exp(x @ params["w_mean"].T + params["b_mean"]), 1e-5, 1e6)
    return [pi, disp, mean]


if __name__ == "__main__":
    # NOTE: train-mode BN (batch statistics) is hard-coded, matching a fresh
    # PyTorch module; eval-mode would need running mean/var inputs instead.
    N, nhid1, nfeat = 8, 32, 64
    key = jax.random.PRNGKey(0)
    k_emb, k_par = jax.random.split(key)

    emb = jax.random.normal(k_emb, (N, nhid1), dtype=jnp.float32)
    params = init_params(k_par, nhid1, nfeat)

    # One-time repack (transpose / fuse / pad) — NOT paid per forward call.
    packed = prepare_params(params, matmul_dtype=jnp.float32)

    outs = zinb_decoder(emb, packed)
    outs = [jax.block_until_ready(o) for o in outs]

    refs = zinb_decoder_ref(emb, params)
    for o, r in zip(outs, refs):
        assert o.shape == (N, nfeat) and o.dtype == jnp.float32
        assert jnp.allclose(o, r, atol=1e-4, rtol=1e-4)

    print("KERNEL_OK")
</pallas_src>

<mosaic_0001>
module attributes {stable_mosaic.version = 11 : i64} {
  func.func @_decoder_kernel(%arg0: memref<8x32xf32, #tpu.memory_space<vmem>>, %arg1: memref<32x32xf32, #tpu.memory_space<vmem>>, %arg2: memref<1x32xf32, #tpu.memory_space<vmem>>, %arg3: memref<1x32xf32, #tpu.memory_space<vmem>>, %arg4: memref<1x32xf32, #tpu.memory_space<vmem>>, %arg5: memref<8x32xf32, #tpu.memory_space<vmem>>) attributes {dimension_semantics = [], scalar_prefetch = 0 : i64, scratch_operands = 0 : i64, tpu.core_type = #tpu.core_type<tc>} {
    %c0 = arith.constant 0 : index
    %c0_0 = arith.constant 0 : index
    %0 = vector.load %arg0[%c0, %c0_0] : memref<8x32xf32, #tpu.memory_space<vmem>>, vector<8x32xf32>
    %c0_1 = arith.constant 0 : index
    %c0_2 = arith.constant 0 : index
    %1 = vector.load %arg1[%c0_1, %c0_2] : memref<32x32xf32, #tpu.memory_space<vmem>>, vector<32x32xf32>
    %cst = arith.constant dense<0.000000e+00> : vector<8x32xf32>
    %2 = tpu.matmul %0, %1, %cst {dimension_numbers = #tpu.dot_dimension_numbers<[1], [0], [0], [1], [0, 0, 1, 1], [], []>} : vector<8x32xf32>, vector<32x32xf32>, vector<8x32xf32> -> vector<8x32xf32>
    %c0_3 = arith.constant 0 : index
    %c0_4 = arith.constant 0 : index
    %3 = vector.load %arg2[%c0_3, %c0_4] : memref<1x32xf32, #tpu.memory_space<vmem>>, vector<1x32xf32>
    %4 = vector.broadcast %3 : vector<1x32xf32> to vector<8x32xf32>
    %5 = arith.addf %2, %4 : vector<8x32xf32>
    %cst_5 = arith.constant dense<0.000000e+00> : vector<32xf32>
    %6 = vector.multi_reduction <add>, %5, %cst_5 [0] : vector<8x32xf32> to vector<32xf32>
    %7 = vector.shape_cast %6 : vector<32xf32> to vector<1x32xf32>
    %cst_6 = arith.constant 8.000000e+00 : f32
    %8 = vector.broadcast %cst_6 : f32 to vector<1x32xf32>
    %9 = arith.divf %7, %8 : vector<1x32xf32>
    %10 = vector.broadcast %9 : vector<1x32xf32> to vector<8x32xf32>
    %11 = arith.subf %5, %10 : vector<8x32xf32>
    %12 = vector.broadcast %9 : vector<1x32xf32> to vector<8x32xf32>
    %13 = arith.subf %5, %12 : vector<8x32xf32>
    %14 = arith.mulf %11, %13 : vector<8x32xf32>
    %cst_7 = arith.constant dense<0.000000e+00> : vector<32xf32>
    %15 = vector.multi_reduction <add>, %14, %cst_7 [0] : vector<8x32xf32> to vector<32xf32>
    %16 = vector.shape_cast %15 : vector<32xf32> to vector<1x32xf32>
    %cst_8 = arith.constant 8.000000e+00 : f32
    %17 = vector.broadcast %cst_8 : f32 to vector<1x32xf32>
    %18 = arith.divf %16, %17 : vector<1x32xf32>
    %19 = vector.broadcast %9 : vector<1x32xf32> to vector<8x32xf32>
    %20 = arith.subf %5, %19 : vector<8x32xf32>
    %cst_9 = arith.constant 9.99999974E-6 : f32
    %21 = vector.broadcast %cst_9 : f32 to vector<1x32xf32>
    %22 = arith.addf %18, %21 : vector<1x32xf32>
    %23 = math.rsqrt %22 : vector<1x32xf32>
    %24 = vector.broadcast %23 : vector<1x32xf32> to vector<8x32xf32>
    %25 = arith.mulf %20, %24 : vector<8x32xf32>
    %c0_10 = arith.constant 0 : index
    %c0_11 = arith.constant 0 : index
    %26 = vector.load %arg3[%c0_10, %c0_11] : memref<1x32xf32, #tpu.memory_space<vmem>>, vector<1x32xf32>
    %27 = vector.broadcast %26 : vector<1x32xf32> to vector<8x32xf32>
    %28 = arith.mulf %25, %27 : vector<8x32xf32>
    %c0_12 = arith.constant 0 : index
    %c0_13 = arith.constant 0 : index
    %29 = vector.load %arg4[%c0_12, %c0_13] : memref<1x32xf32, #tpu.memory_space<vmem>>, vector<1x32xf32>
    %30 = vector.broadcast %29 : vector<1x32xf32> to vector<8x32xf32>
    %31 = arith.addf %28, %30 : vector<8x32xf32>
    %cst_14 = arith.constant 0.000000e+00 : f32
    %32 = vector.broadcast %cst_14 : f32 to vector<8x32xf32>
    %33 = arith.maximumf %31, %32 : vector<8x32xf32>
    %c0_15 = arith.constant 0 : index
    %c0_16 = arith.constant 0 : index
    %34 = vector.load %arg5[%c0_15, %c0_16] : memref<8x32xf32, #tpu.memory_space<vmem>>, vector<8x32xf32>
    tpu.vector_store %arg5[%c0_15, %c0_16], %33 {strides = array<i32>} : memref<8x32xf32, #tpu.memory_space<vmem>>, vector<8x32xf32>,
    return
  }
}

</mosaic_0001>

<llo_original>
// kernel: tpu_custom_call.1
$region0: #{tpu_custom_call.1}
  #allocation0 [shape = 'u32[]', space=smem, size = 0x4, offset = 0x4, fixed_abs, tag = 'smem constant byte address 0x4 - core index']
  #allocation1 [shape = 'u32[144,128]{1,0:T(1,128)}', space=vmem, size = 0x12000, scoped, tag = 'internal scratch']
  %s0 = inlined_call_operand.hbm [shape: f32[8,32], index: 0, kind: input, shape index: {}]
  %s1 = inlined_call_operand.hbm [shape: f32[32,32], index: 1, kind: input, shape index: {}]
  %s2 = inlined_call_operand.vmem [shape: f32[1,32], index: 2, kind: input, shape index: {}]
  %s3 = inlined_call_operand.vmem [shape: f32[1,32], index: 3, kind: input, shape index: {}]
  %s4 = inlined_call_operand.vmem [shape: f32[1,32], index: 4, kind: input, shape index: {}]
  %s5 = inlined_call_operand.hbm [shape: f32[8,32], index: 5, kind: output, shape index: {}]
  %s6 = sld [smem:[#allocation0]]
  $region38: #{tpu_custom_call.1} parent=0
    _
  %s8 = ssub.s32 1, %s6
  %s9 = scalar_select 0, %s8, %s6
  $region1: #{tpu_custom_call.1} parent=0
    #allocation2 [shape = 'u8[4096]{0}', space=vmem, size = 0x1000, scoped, tag = 'input window, operand 0, single buffered']
    #allocation3 [shape = 's32[1]{0}', space=sflag, size = 0x4, scoped, tag = 'scoped memory for tpu_custom_call.1']
    #allocation4 [shape = 's32[1]{0}', space=sflag, size = 0x4, scoped, tag = 'scoped memory for tpu_custom_call.1']
    #allocation5 [shape = 'u8[16384]{0}', space=vmem, size = 0x4000, scoped, tag = 'input window, operand 1, single buffered']
    #allocation6 [shape = 's32[1]{0}', space=sflag, size = 0x4, scoped, tag = 'scoped memory for tpu_custom_call.1']
    #allocation7 [shape = 'u8[4096]{0}', space=vmem, size = 0x1000, scoped, tag = 'output window, operand 0, single buffered']
    %10 = vsyncpa [#allocation3], 0
    %11 = vsyncpa [#allocation6], 0
    %12 = vsyncpa [#allocation4], 0
    // Predicated region
    $region2: #{tpu_custom_call.1} parent=1 // pred_check
      _
    $region3: #{tpu_custom_call.1} parent=1 // pred_check_branch
      %14 = sbr.rel (0) target = $region5
    $region4: #{tpu_custom_call.1} parent=1 // pred_region
      %s16 = ssub.s32 128, 128
      %17 = vsyncadd [#allocation3], %s16
      %s19 = sshll.u32 [#allocation2], 4
      %s20 = int_to_ptr.vmem [resolvable:$true] %s19
      %22 = dma.hbm_to_vmem [thread:$0]  %s0, 128, %s20, [#allocation3]
    $region5: #{tpu_custom_call.1} parent=1 // pred_fallthru
      _
    // Predicated region
    $region6: #{tpu_custom_call.1} parent=1 // pred_check
      _
    $region7: #{tpu_custom_call.1} parent=1 // pred_check_branch
      %24 = sbr.rel (0) target = $region9
    $region8: #{tpu_custom_call.1} parent=1 // pred_region
      %s26 = ssub.s32 512, 512
      %27 = vsyncadd [#allocation6], %s26
      %s28 = sshll.u32 [#allocation5], 4
      %s29 = int_to_ptr.vmem [resolvable:$true] %s28
      %34 = dma.hbm_to_vmem [thread:$0]  %s1, 512, %s29, [#allocation6], 128, 128, 8
    $region9: #{tpu_custom_call.1} parent=1 // pred_fallthru
      _
    // Predicated region
    $region10: #{tpu_custom_call.1} parent=1 // pred_check
      _
    $region11: #{tpu_custom_call.1} parent=1 // pred_check_branch
      %36 = sbr.rel (0) target = $region13
    $region12: #{tpu_custom_call.1} parent=1 // pred_region
      _
    $region13: #{tpu_custom_call.1} parent=1 // pred_fallthru
      _
    // Predicated region
    $region14: #{tpu_custom_call.1} parent=1 // pred_check
      _
    $region15: #{tpu_custom_call.1} parent=1 // pred_check_branch
      %38 = sbr.rel (0) target = $region17
    $region16: #{tpu_custom_call.1} parent=1 // pred_region
      _
    $region17: #{tpu_custom_call.1} parent=1 // pred_fallthru
      _
    // Predicated region
    $region18: #{tpu_custom_call.1} parent=1 // pred_check
      _
    $region19: #{tpu_custom_call.1} parent=1 // pred_check_branch
      %40 = sbr.rel (0) target = $region21
    $region20: #{tpu_custom_call.1} parent=1 // pred_region
      _
    $region21: #{tpu_custom_call.1} parent=1 // pred_fallthru
      _
    // Predicated region
    $region22: #{tpu_custom_call.1} parent=1 // pred_check
      _
    $region23: #{tpu_custom_call.1} parent=1 // pred_check_branch
      %42 = sbr.rel (0) target = $region25
    $region24: #{tpu_custom_call.1} parent=1 // pred_region
      %43 = dma.done [#allocation3], 128
    $region25: #{tpu_custom_call.1} parent=1 // pred_fallthru
      _
    // Predicated region
    $region26: #{tpu_custom_call.1} parent=1 // pred_check
      _
    $region27: #{tpu_custom_call.1} parent=1 // pred_check_branch
      %45 = sbr.rel (0) target = $region29
    $region28: #{tpu_custom_call.1} parent=1 // pred_region
      %46 = dma.done [#allocation6], 512
    $region29: #{tpu_custom_call.1} parent=1 // pred_fallthru
      _
    %v47 = vld [vmem:[#allocation2] sm:$0xff]
    %v48 = vld [vmem:[#allocation5] sm:$0xff]
    %v49 = vld [vmem:[#allocation5 + $0x8] sm:$0xff]
    %v50 = vld [vmem:[#allocation5 + $0x10] sm:$0xff]
    %v51 = vld [vmem:[#allocation5 + $0x18] sm:$0xff]
    %v52 = vld [vmem:[%s2] sm:$0x1]
    %v54 = vlaneseq
    %v55 = vshrl.u32 %v54, 7
    %v56 = vsub.s32 0, %v55
    %v57 = vrot.slane %v52, %v56
    %vm59 = vcmask 261120
    %v61 = vsel %vm59, %v47, 0
    %63 = vmatprep.subr.mxu0 0.0
    %64 = vmatpush1.msra.mxu0 %v48
    %65 = vmatprep.subr.mxu0 0.0
    %66 = vmatpush1.msra.mxu0 %v49
    %67 = vmatprep.subr.mxu0 0.0
    %68 = vmatpush1.msra.mxu0 %v50
    %69 = vmatprep.subr.mxu0 0.0
    %70 = vmatpush1.msra.mxu0 %v51
    %71 = vmatprep.subr.mxu0 0.0
    %72 = vmatpush1.msra.mxu0 0.0
    %73 = vmatprep.subr.mxu0 0.0
    %74 = vmatpush1.msra.mxu0 0.0
    %75 = vmatprep.subr.mxu0 0.0
    %76 = vmatpush1.msra.mxu0 0.0
    %77 = vmatprep.subr.mxu0 0.0
    %78 = vmatpush1.msra.mxu0 0.0
    %79 = vmatprep.subr.mxu0 0.0
    %80 = vmatpush1.msra.mxu0 0.0
    %81 = vmatprep.subr.mxu0 0.0
    %82 = vmatpush1.msra.mxu0 0.0
    %83 = vmatprep.subr.mxu0 0.0
    %84 = vmatpush1.msra.mxu0 0.0
    %85 = vmatprep.subr.mxu0 0.0
    %86 = vmatpush1.msra.mxu0 0.0
    %87 = vmatprep.subr.mxu0 0.0
    %88 = vmatpush1.msra.mxu0 0.0
    %89 = vmatprep.subr.mxu0 0.0
    %90 = vmatpush1.msra.mxu0 0.0
    %91 = vmatprep.subr.mxu0 0.0
    %92 = vmatpush1.msra.mxu0 0.0
    %93 = vmatprep.subr.mxu0 0.0
    %94 = vmatpush1.msra.mxu0 0.0
    %95 = vmatprep.subr.mxu0 0.0
    %96 = vmatpush1.msra.mxu0 0.0
    %97 = vmatprep.subr.mxu0 0.0
    %98 = vmatpush1.msra.mxu0 0.0
    %99 = vmatprep.subr.mxu0 0.0
    %100 = vmatpush1.msra.mxu0 0.0
    %101 = vmatprep.subr.mxu0 0.0
    %102 = vmatpush1.msra.mxu0 0.0
    %103 = vmatprep.subr.mxu0 0.0
    %104 = vmatpush1.msra.mxu0 0.0
    %105 = vmatprep.subr.mxu0 0.0
    %106 = vmatpush1.msra.mxu0 0.0
    %107 = vmatprep.subr.mxu0 0.0
    %108 = vmatpush1.msra.mxu0 0.0
    %109 = vmatprep.subr.mxu0 0.0
    %110 = vmatpush1.msra.mxu0 0.0
    %111 = vmatprep.subr.mxu0 0.0
    %112 = vmatpush1.msra.mxu0 0.0
    %113 = vmatprep.subr.mxu0 0.0
    %114 = vmatpush1.msra.mxu0 0.0
    %115 = vmatprep.subr.mxu0 0.0
    %116 = vmatpush1.msra.mxu0 0.0
    %117 = vmatprep.subr.mxu0 0.0
    %118 = vmatpush1.msra.mxu0 0.0
    %119 = vmatprep.subr.mxu0 0.0
    %120 = vmatpush1.msra.mxu0 0.0
    %121 = vmatprep.subr.mxu0 0.0
    %122 = vmatpush1.msra.mxu0 0.0
    %123 = vmatprep.subr.mxu0 0.0
    %124 = vmatpush1.msra.mxu0 0.0
    %125 = vmatprep.subr.mxu0 0.0
    %126 = vmatpush1.msra.mxu0 0.0
    %127 = vmatprep.mubr.f32.mxu0 0.0
    %128 = vmatmul.mubr.f32.gmra.mrb[0].mxu0 %v61
    %v129 = vpop.f32.mrb[0].mxu0
    %v130 = vadd.f32 %v57, %v129
    %v131 = vpop.f32.mrb[0].mxu0
    %132 = vdwg.mxu0
    %v133 = vsel %vm59, %v130, 0.0
    %v134 = vrot.slane %v133, 4
    %v135 = vadd.f32 %v133, %v134
    %v136 = vrot.slane %v135, 2
    %v137 = vadd.f32 %v135, %v136
    %v138 = vrot.slane %v137, 1
    %v139 = vadd.f32 %v137, %v138
    %v140 = vrcp.pop 8.0
    %v141 = vmul.f32 %v139, %v140
    %v142 = vsub.f32 %v130, %v141
    %v143 = vmul.f32 %v142, %v142
    %v144 = vsel %vm59, %v143, 0.0
    %v145 = vrot.slane %v144, 4
    %v146 = vadd.f32 %v144, %v145
    %v147 = vrot.slane %v146, 2
    %v148 = vadd.f32 %v146, %v147
    %v149 = vrot.slane %v148, 1
    %v150 = vadd.f32 %v148, %v149
    %v151 = vmul.f32 %v150, %v140
    %v152 = vadd.f32 %v151, 1e-05
    %v153 = vrsqrt.pop %v152
    %v154 = vmul.f32 %v142, %v153
    %v155 = vld [vmem:[%s3] sm:$0x1]
    %v157 = vlaneseq
    %v158 = vshrl.u32 %v157, 7
    %v159 = vsub.s32 0, %v158
    %v160 = vrot.slane %v155, %v159
    %v162 = vmul.f32 %v154, %v160
    %v163 = vld [vmem:[%s4] sm:$0x1]
    %v165 = vlaneseq
    %v166 = vshrl.u32 %v165, 7
    %v167 = vsub.s32 0, %v166
    %v168 = vrot.slane %v163, %v167
    %v170 = vadd.f32 %v162, %v168
    %v171 = vmax.f32 %v170, 0.0
    %172 = vst.msk [vmem:[#allocation7] sm:$0xff] %vm59, %v171
    // Predicated region
    $region30: #{tpu_custom_call.1} parent=1 // pred_check
      _
    $region31: #{tpu_custom_call.1} parent=1 // pred_check_branch
      %174 = sbr.rel (0) target = $region33
    $region32: #{tpu_custom_call.1} parent=1 // pred_region
      %s176 = ssub.s32 128, 128
      %177 = vsyncadd [#allocation4], %s176
      %s179 = sshll.u32 [#allocation7], 4
      %s180 = int_to_ptr.vmem [resolvable:$true] %s179
      %182 = dma.vmem_to_hbm [thread:$0]  %s180, 128, %s5, [#allocation4]
    $region33: #{tpu_custom_call.1} parent=1 // pred_fallthru
      _
    // Predicated region
    $region34: #{tpu_custom_call.1} parent=1 // pred_check
      _
    $region35: #{tpu_custom_call.1} parent=1 // pred_check_branch
      %184 = sbr.rel (0) target = $region37
    $region36: #{tpu_custom_call.1} parent=1 // pred_region
      %185 = dma.done [#allocation4], 128
    $region37: #{tpu_custom_call.1} parent=1 // pred_fallthru
      _
    %186 = vsyncpa [#allocation3], 1
    %187 = vsyncpa [#allocation6], 1
    %188 = vsyncpa [#allocation4], 1

</llo_original>
